<compile_context>
chip_gen: v6e
topology: v6e:2x2x1
jax: 0.10.0
libtpu: 0.0.40
codegen_flags: <defaults>
</compile_context>

<pallas_src>
import jax
import jax.numpy as jnp
from jax.experimental import pallas as pl
from jax.experimental.pallas import tpu as pltpu


def _sigmoid(z):
    return 1.0 / (1.0 + jnp.exp(-z))


def _make_lstm_layer_kernel(hidden: int, with_pos: bool):
    """One LSTM layer over the full sequence of a (S, tb, Din) batch tile."""

    def kernel(*refs):
        if with_pos:
            x_ref, pos_ref, w_ih_ref, w_hh_ref, b_ref, o_ref, h_scr, c_scr = refs
        else:
            x_ref, w_ih_ref, w_hh_ref, b_ref, o_ref, h_scr, c_scr = refs
            pos_ref = None

        seq_len = x_ref.shape[0]
        H = hidden

        # h_0 = c_0 = 0 for every batch tile (grid step).
        h_scr[...] = jnp.zeros_like(h_scr)
        c_scr[...] = jnp.zeros_like(c_scr)

        # Load weights once; they stay resident across the whole time loop.
        w_ih = w_ih_ref[...]
        w_hh = w_hh_ref[...]
        b = b_ref[...]

        @pl.loop(0, seq_len)
        def _(t):
            x_t = x_ref[t].astype(jnp.float32)                   # (tb, Din)
            if with_pos:
                x_t = x_t + pos_ref[t].astype(jnp.float32)       # (1, Din) bcast
            h_prev = h_scr[...]
            # Fused gate matmuls: (tb, 4H), f32 accumulation on the MXU.
            gates = (
                jnp.dot(x_t, w_ih, preferred_element_type=jnp.float32)
                + jnp.dot(h_prev, w_hh, preferred_element_type=jnp.float32)
                + b
            )
            i_g = _sigmoid(gates[:, 0 * H:1 * H])
            f_g = _sigmoid(gates[:, 1 * H:2 * H])
            g_g = jnp.tanh(gates[:, 2 * H:3 * H])
            o_g = _sigmoid(gates[:, 3 * H:4 * H])
            c_new = f_g * c_scr[...] + i_g * g_g
            h_new = o_g * jnp.tanh(c_new)
            c_scr[...] = c_new
            h_scr[...] = h_new
            o_ref[t] = h_new.astype(o_ref.dtype)

    return kernel


def _fc_kernel(h_ref, w_ref, b_ref, o_ref):
    # h_ref is a (1, B, H) view of the LAST timestep (selected by index_map).
    h = h_ref[0].astype(jnp.float32)                             # (B, H)
    o_ref[...] = (
        jnp.dot(h, w_ref[...], preferred_element_type=jnp.float32) + b_ref[...]
    ).astype(o_ref.dtype)


def _lstm_layer(x_sbd, pos_s1d, w_ih, w_hh, b, *, hidden, with_pos, tb=None):
    """x_sbd: (S, B, Din) time-major. Returns (S, B, H)."""
    S, B, Din = x_sbd.shape
    H = hidden
    if tb is None:
        tb = B  # toy batch: one tile; real batches: pick tb % 8 == 0, B//tb >= 2
    assert B % tb == 0 and (tb == B or tb % 8 == 0), "batch tile must be 8-aligned"

    in_arrays = [x_sbd]
    in_specs = [pl.BlockSpec((S, tb, Din), lambda i: (0, i, 0))]
    if with_pos:
        in_arrays.append(pos_s1d)
        in_specs.append(pl.BlockSpec((S, 1, Din), lambda i: (0, 0, 0)))
    in_arrays += [w_ih, w_hh, b]
    in_specs += [
        pl.BlockSpec((Din, 4 * H), lambda i: (0, 0)),   # constant index -> loaded once
        pl.BlockSpec((H, 4 * H), lambda i: (0, 0)),
        pl.BlockSpec((1, 4 * H), lambda i: (0, 0)),
    ]

    return pl.pallas_call(
        _make_lstm_layer_kernel(H, with_pos),
        out_shape=jax.ShapeDtypeStruct((S, B, H), x_sbd.dtype),
        grid=(B // tb,),
        in_specs=in_specs,
        out_specs=pl.BlockSpec((S, tb, H), lambda i: (0, i, 0)),
        scratch_shapes=[
            pltpu.VMEM((tb, H), jnp.float32),   # h state
            pltpu.VMEM((tb, H), jnp.float32),   # c state
        ],
        compiler_params=pltpu.CompilerParams(
            dimension_semantics=("parallel",)),
    )(*in_arrays)


def _final_linear(h_seq_sbh, w_fc, b_fc):
    """Apply fc to the last timestep only: (S, B, H) -> (B, num_tokens)."""
    S, B, H = h_seq_sbh.shape
    T = w_fc.shape[1]
    return pl.pallas_call(
        _fc_kernel,
        out_shape=jax.ShapeDtypeStruct((B, T), h_seq_sbh.dtype),
        grid=(1,),
        in_specs=[
            pl.BlockSpec((1, B, H), lambda i: (S - 1, 0, 0)),   # last timestep
            pl.BlockSpec((H, T), lambda i: (0, 0)),
            pl.BlockSpec((1, T), lambda i: (0, 0)),
        ],
        out_specs=pl.BlockSpec((B, T), lambda i: (0, 0)),
    )(h_seq_sbh, w_fc, b_fc)


def lstm_model_forward(x, pos_table, layer_params, w_fc, b_fc):
    """x: (B, S, D); pos_table: (S, D); layer_params: list of (w_ih, w_hh, b)."""
    B, S, D = x.shape
    # time-major layout: the recurrent loop indexes the leading ref axis.
    h = jnp.transpose(x, (1, 0, 2))                 # (S, B, D)
    pos = pos_table.reshape(S, 1, D)
    for l, (w_ih, w_hh, b) in enumerate(layer_params):
        hidden = w_hh.shape[0]
        h = _lstm_layer(h, pos, w_ih, w_hh, b, hidden=hidden, with_pos=(l == 0))
    return _final_linear(h, w_fc, b_fc)             # (B, num_tokens)


# --------------------------- pure-JAX reference ---------------------------

def _reference(x, pos_table, layer_params, w_fc, b_fc):
    B, S, D = x.shape
    h_seq = x + pos_table[None, :, :]               # (B, S, D)
    for (w_ih, w_hh, b) in layer_params:
        H = w_hh.shape[0]
        h = jnp.zeros((B, H), jnp.float32)
        c = jnp.zeros((B, H), jnp.float32)
        outs = []
        for t in range(S):
            x_t = h_seq[:, t, :]
            gates = x_t @ w_ih + h @ w_hh + b
            i_g = _sigmoid(gates[:, 0 * H:1 * H])
            f_g = _sigmoid(gates[:, 1 * H:2 * H])
            g_g = jnp.tanh(gates[:, 2 * H:3 * H])
            o_g = _sigmoid(gates[:, 3 * H:4 * H])
            c = f_g * c + i_g * g_g
            h = o_g * jnp.tanh(c)
            outs.append(h)
        h_seq = jnp.stack(outs, axis=1)             # (B, S, H)
    return h_seq[:, -1, :] @ w_fc + b_fc


if __name__ == "__main__":
    num_layers = 2
    dim_model = 32
    hidden_dim = 32       # 4*H = 128 -> lane-dense gate matmuls
    num_tokens = 16
    seq_len = 8
    batch = 2

    key = jax.random.PRNGKey(0)
    key, kx, kp = jax.random.split(key, 3)
    x = jax.random.normal(kx, (batch, seq_len, dim_model), jnp.float32)
    pos_table = 0.1 * jax.random.normal(kp, (seq_len, dim_model), jnp.float32)

    lim = 1.0 / (hidden_dim ** 0.5)   # torch.nn.LSTM init range
    layer_params = []
    for l in range(num_layers):
        din = dim_model if l == 0 else hidden_dim
        key, k1, k2, k3 = jax.random.split(key, 4)
        w_ih = jax.random.uniform(k1, (din, 4 * hidden_dim), jnp.float32, -lim, lim)
        w_hh = jax.random.uniform(k2, (hidden_dim, 4 * hidden_dim), jnp.float32, -lim, lim)
        b = jax.random.uniform(k3, (1, 4 * hidden_dim), jnp.float32, -lim, lim)  # b_ih + b_hh pre-summed
        layer_params.append((w_ih, w_hh, b))

    key, kw, kb = jax.random.split(key, 3)
    limf = 1.0 / (hidden_dim ** 0.5)
    w_fc = jax.random.uniform(kw, (hidden_dim, num_tokens), jnp.float32, -limf, limf)
    b_fc = jax.random.uniform(kb, (1, num_tokens), jnp.float32, -limf, limf)

    out = lstm_model_forward(x, pos_table, layer_params, w_fc, b_fc)
    out = jax.block_until_ready(out)

    ref = _reference(x, pos_table, layer_params, w_fc, b_fc)
    assert out.shape == (batch, num_tokens)
    assert jnp.allclose(out, ref, atol=1e-4, rtol=1e-4), "mismatch vs reference"

    print("KERNEL_OK")
</pallas_src>

<mosaic_0001>
module attributes {stable_mosaic.version = 11 : i64} {
  func.func @kernel(%arg0: i32, %arg1: memref<8x2x32xf32, #tpu.memory_space<vmem>>, %arg2: memref<8x1x32xf32, #tpu.memory_space<vmem>>, %arg3: memref<32x128xf32, #tpu.memory_space<vmem>>, %arg4: memref<32x128xf32, #tpu.memory_space<vmem>>, %arg5: memref<1x128xf32, #tpu.memory_space<vmem>>, %arg6: memref<8x2x32xf32, #tpu.memory_space<vmem>>, %arg7: memref<2x32xf32, #tpu.memory_space<vmem>>, %arg8: memref<2x32xf32, #tpu.memory_space<vmem>>) attributes {dimension_semantics = [#tpu.dimension_semantics<parallel>], iteration_bounds = array<i64: 1>, scalar_prefetch = 0 : i64, scratch_operands = 2 : i64, tpu.core_type = #tpu.core_type<tc>, window_params = [{transform_indices = @transform_0, window_bounds = array<i64: 8, 2, 32>}, {pipeline_mode = #tpu.pipeline_mode<synchronous>, transform_indices = @transform_1, window_bounds = array<i64: 8, 1, 32>}, {pipeline_mode = #tpu.pipeline_mode<synchronous>, transform_indices = @transform_2, window_bounds = array<i64: 32, 128>}, {pipeline_mode = #tpu.pipeline_mode<synchronous>, transform_indices = @transform_3, window_bounds = array<i64: 32, 128>}, {pipeline_mode = #tpu.pipeline_mode<synchronous>, transform_indices = @transform_4, window_bounds = array<i64: 1, 128>}, {transform_indices = @transform_5, window_bounds = array<i64: 8, 2, 32>}]} {
    %cst = arith.constant 0.000000e+00 : f32
    %0 = vector.broadcast %cst : f32 to vector<2x32xf32>
    %c0 = arith.constant 0 : index
    %c0_0 = arith.constant 0 : index
    %1 = vector.load %arg7[%c0, %c0_0] : memref<2x32xf32, #tpu.memory_space<vmem>>, vector<2x32xf32>
    tpu.vector_store %arg7[%c0, %c0_0], %0 {strides = array<i32>} : memref<2x32xf32, #tpu.memory_space<vmem>>, vector<2x32xf32>,
    %cst_1 = arith.constant 0.000000e+00 : f32
    %2 = vector.broadcast %cst_1 : f32 to vector<2x32xf32>
    %c0_2 = arith.constant 0 : index
    %c0_3 = arith.constant 0 : index
    %3 = vector.load %arg8[%c0_2, %c0_3] : memref<2x32xf32, #tpu.memory_space<vmem>>, vector<2x32xf32>
    tpu.vector_store %arg8[%c0_2, %c0_3], %2 {strides = array<i32>} : memref<2x32xf32, #tpu.memory_space<vmem>>, vector<2x32xf32>,
    %c0_4 = arith.constant 0 : index
    %c0_5 = arith.constant 0 : index
    %4 = vector.load %arg3[%c0_4, %c0_5] : memref<32x128xf32, #tpu.memory_space<vmem>>, vector<32x128xf32>
    %c0_6 = arith.constant 0 : index
    %c0_7 = arith.constant 0 : index
    %5 = vector.load %arg4[%c0_6, %c0_7] : memref<32x128xf32, #tpu.memory_space<vmem>>, vector<32x128xf32>
    %c0_8 = arith.constant 0 : index
    %c0_9 = arith.constant 0 : index
    %6 = vector.load %arg5[%c0_8, %c0_9] : memref<1x128xf32, #tpu.memory_space<vmem>>, vector<1x128xf32>
    %c0_i32 = arith.constant 0 : i32
    %c8_i32 = arith.constant 8 : i32
    %7 = arith.addi %c0_i32, %c8_i32 : i32
    %c1_i32 = arith.constant 1 : i32
    scf.for %arg9 = %c0_i32 to %7 step %c1_i32  : i32 {
      %c1_i32_11 = arith.constant 1 : i32
      %8 = arith.muli %arg9, %c1_i32_11 : i32
      %c0_i32_12 = arith.constant 0 : i32
      %9 = arith.addi %c0_i32_12, %8 : i32
      %10 = arith.index_cast %9 : i32 to index
      %c0_13 = arith.constant 0 : index
      %c0_14 = arith.constant 0 : index
      %11 = vector.load %arg1[%10, %c0_13, %c0_14] : memref<8x2x32xf32, #tpu.memory_space<vmem>>, vector<1x2x32xf32>
      %12 = vector.shape_cast %11 : vector<1x2x32xf32> to vector<2x32xf32>
      %13 = arith.index_cast %9 : i32 to index
      %c0_15 = arith.constant 0 : index
      %c0_16 = arith.constant 0 : index
      %14 = vector.load %arg2[%13, %c0_15, %c0_16] : memref<8x1x32xf32, #tpu.memory_space<vmem>>, vector<1x1x32xf32>
      %15 = vector.shape_cast %14 : vector<1x1x32xf32> to vector<1x32xf32>
      %16 = vector.broadcast %15 : vector<1x32xf32> to vector<2x32xf32>
      %17 = arith.addf %12, %16 : vector<2x32xf32>
      %c0_17 = arith.constant 0 : index
      %c0_18 = arith.constant 0 : index
      %18 = vector.load %arg7[%c0_17, %c0_18] : memref<2x32xf32, #tpu.memory_space<vmem>>, vector<2x32xf32>
      %cst_19 = arith.constant dense<0.000000e+00> : vector<2x128xf32>
      %19 = tpu.matmul %17, %4, %cst_19 {dimension_numbers = #tpu.dot_dimension_numbers<[1], [0], [0], [1], [0, 0, 1, 1], [], []>} : vector<2x32xf32>, vector<32x128xf32>, vector<2x128xf32> -> vector<2x128xf32>
      %cst_20 = arith.constant dense<0.000000e+00> : vector<2x128xf32>
      %20 = tpu.matmul %18, %5, %cst_20 {dimension_numbers = #tpu.dot_dimension_numbers<[1], [0], [0], [1], [0, 0, 1, 1], [], []>} : vector<2x32xf32>, vector<32x128xf32>, vector<2x128xf32> -> vector<2x128xf32>
      %21 = arith.addf %19, %20 : vector<2x128xf32>
      %22 = vector.broadcast %6 : vector<1x128xf32> to vector<2x128xf32>
      %23 = arith.addf %21, %22 : vector<2x128xf32>
      %24 = vector.extract_strided_slice %23 {offsets = [0, 0], sizes = [2, 32], strides = [1, 1]} : vector<2x128xf32> to vector<2x32xf32>
      %cst_21 = arith.constant 0.000000e+00 : f32
      %25 = vector.broadcast %cst_21 : f32 to vector<2x32xf32>
      %26 = arith.subf %25, %24 : vector<2x32xf32>
      %27 = math.exp %26 : vector<2x32xf32>
      %cst_22 = arith.constant 1.000000e+00 : f32
      %28 = vector.broadcast %cst_22 : f32 to vector<2x32xf32>
      %29 = arith.addf %28, %27 : vector<2x32xf32>
      %cst_23 = arith.constant 1.000000e+00 : f32
      %30 = vector.broadcast %cst_23 : f32 to vector<2x32xf32>
      %31 = arith.divf %30, %29 : vector<2x32xf32>
      %32 = vector.extract_strided_slice %23 {offsets = [0, 32], sizes = [2, 32], strides = [1, 1]} : vector<2x128xf32> to vector<2x32xf32>
      %cst_24 = arith.constant 0.000000e+00 : f32
      %33 = vector.broadcast %cst_24 : f32 to vector<2x32xf32>
      %34 = arith.subf %33, %32 : vector<2x32xf32>
      %35 = math.exp %34 : vector<2x32xf32>
      %cst_25 = arith.constant 1.000000e+00 : f32
      %36 = vector.broadcast %cst_25 : f32 to vector<2x32xf32>
      %37 = arith.addf %36, %35 : vector<2x32xf32>
      %cst_26 = arith.constant 1.000000e+00 : f32
      %38 = vector.broadcast %cst_26 : f32 to vector<2x32xf32>
      %39 = arith.divf %38, %37 : vector<2x32xf32>
      %40 = vector.extract_strided_slice %23 {offsets = [0, 64], sizes = [2, 32], strides = [1, 1]} : vector<2x128xf32> to vector<2x32xf32>
      %41 = math.tanh %40 : vector<2x32xf32>
      %42 = vector.extract_strided_slice %23 {offsets = [0, 96], sizes = [2, 32], strides = [1, 1]} : vector<2x128xf32> to vector<2x32xf32>
      %cst_27 = arith.constant 0.000000e+00 : f32
      %43 = vector.broadcast %cst_27 : f32 to vector<2x32xf32>
      %44 = arith.subf %43, %42 : vector<2x32xf32>
      %45 = math.exp %44 : vector<2x32xf32>
      %cst_28 = arith.constant 1.000000e+00 : f32
      %46 = vector.broadcast %cst_28 : f32 to vector<2x32xf32>
      %47 = arith.addf %46, %45 : vector<2x32xf32>
      %cst_29 = arith.constant 1.000000e+00 : f32
      %48 = vector.broadcast %cst_29 : f32 to vector<2x32xf32>
      %49 = arith.divf %48, %47 : vector<2x32xf32>
      %c0_30 = arith.constant 0 : index
      %c0_31 = arith.constant 0 : index
      %50 = vector.load %arg8[%c0_30, %c0_31] : memref<2x32xf32, #tpu.memory_space<vmem>>, vector<2x32xf32>
      %51 = arith.mulf %39, %50 : vector<2x32xf32>
      %52 = arith.mulf %31, %41 : vector<2x32xf32>
      %53 = arith.addf %51, %52 : vector<2x32xf32>
      %54 = math.tanh %53 : vector<2x32xf32>
      %55 = arith.mulf %49, %54 : vector<2x32xf32>
      %c0_32 = arith.constant 0 : index
      %c0_33 = arith.constant 0 : index
      %56 = vector.load %arg8[%c0_32, %c0_33] : memref<2x32xf32, #tpu.memory_space<vmem>>, vector<2x32xf32>
      tpu.vector_store %arg8[%c0_32, %c0_33], %53 {strides = array<i32>} : memref<2x32xf32, #tpu.memory_space<vmem>>, vector<2x32xf32>,
      %c0_34 = arith.constant 0 : index
      %c0_35 = arith.constant 0 : index
      %57 = vector.load %arg7[%c0_34, %c0_35] : memref<2x32xf32, #tpu.memory_space<vmem>>, vector<2x32xf32>
      tpu.vector_store %arg7[%c0_34, %c0_35], %55 {strides = array<i32>} : memref<2x32xf32, #tpu.memory_space<vmem>>, vector<2x32xf32>,
      %58 = arith.index_cast %9 : i32 to index
      %c0_36 = arith.constant 0 : index
      %c0_37 = arith.constant 0 : index
      %59 = vector.load %arg6[%58, %c0_36, %c0_37] : memref<8x2x32xf32, #tpu.memory_space<vmem>>, vector<1x2x32xf32>
      %60 = vector.shape_cast %59 : vector<1x2x32xf32> to vector<2x32xf32>
      %61 = vector.shape_cast %55 : vector<2x32xf32> to vector<1x2x32xf32>
      tpu.vector_store %arg6[%58, %c0_36, %c0_37], %61 {strides = array<i32>} : memref<8x2x32xf32, #tpu.memory_space<vmem>>, vector<1x2x32xf32>,
    }
    %c8_i32_10 = arith.constant 8 : i32
    return
  }
  func.func @transform_0(%arg0: i32) -> (i32, i32, i32) {
    %c0_i32 = arith.constant 0 : i32
    %c0_i32_0 = arith.constant 0 : i32
    %c0_i32_1 = arith.constant 0 : i32
    return %c0_i32, %arg0, %c0_i32_0 : i32, i32, i32
  }
  func.func @transform_1(%arg0: i32) -> (i32, i32, i32) {
    %c0_i32 = arith.constant 0 : i32
    %c0_i32_0 = arith.constant 0 : i32
    %c0_i32_1 = arith.constant 0 : i32
    %c0_i32_2 = arith.constant 0 : i32
    return %c0_i32, %c0_i32_0, %c0_i32_1 : i32, i32, i32
  }
  func.func @transform_2(%arg0: i32) -> (i32, i32) {
    %c0_i32 = arith.constant 0 : i32
    %c0_i32_0 = arith.constant 0 : i32
    %c0_i32_1 = arith.constant 0 : i32
    return %c0_i32, %c0_i32_0 : i32, i32
  }
  func.func @transform_3(%arg0: i32) -> (i32, i32) {
    %c0_i32 = arith.constant 0 : i32
    %c0_i32_0 = arith.constant 0 : i32
    %c0_i32_1 = arith.constant 0 : i32
    return %c0_i32, %c0_i32_0 : i32, i32
  }
  func.func @transform_4(%arg0: i32) -> (i32, i32) {
    %c0_i32 = arith.constant 0 : i32
    %c0_i32_0 = arith.constant 0 : i32
    %c0_i32_1 = arith.constant 0 : i32
    return %c0_i32, %c0_i32_0 : i32, i32
  }
  func.func @transform_5(%arg0: i32) -> (i32, i32, i32) {
    %c0_i32 = arith.constant 0 : i32
    %c0_i32_0 = arith.constant 0 : i32
    %c0_i32_1 = arith.constant 0 : i32
    return %c0_i32, %arg0, %c0_i32_0 : i32, i32, i32
  }
}

</mosaic_0001>

<llo_original>
// kernel: tpu_custom_call.1
$region0: #{tpu_custom_call.1}
  #allocation0 [shape = 'u32[]', space=smem, size = 0x4, offset = 0x4, fixed_abs, tag = 'smem constant byte address 0x4 - core index']
  #allocation1 [shape = 'u32[144,128]{1,0:T(1,128)}', space=vmem, size = 0x12000, scoped, tag = 'internal scratch']
  #allocation2 [shape = 'f32[2,32]{1,0:T(2,128)}', space=vmem, size = 0x400, scoped, tag = 'scratch operand']
  #allocation3 [shape = 'f32[2,32]{1,0:T(2,128)}', space=vmem, size = 0x400, scoped, tag = 'scratch operand']
  %s0 = inlined_call_operand.hbm [shape: f32[8,2,32], index: 0, kind: input, shape index: {}]
  %s1 = inlined_call_operand.hbm [shape: f32[8,1,32], index: 1, kind: input, shape index: {}]
  %s2 = inlined_call_operand.hbm [shape: f32[32,128], index: 2, kind: input, shape index: {}]
  %s3 = inlined_call_operand.hbm [shape: f32[32,128], index: 3, kind: input, shape index: {}]
  %s4 = inlined_call_operand.vmem [shape: f32[1,128], index: 4, kind: input, shape index: {}]
  %s5 = inlined_call_operand.hbm [shape: f32[8,2,32], index: 5, kind: output, shape index: {}]
  %s6 = sld [smem:[#allocation0]]
  $region53: #{tpu_custom_call.1} parent=0
    _
  %s8 = ssub.s32 1, %s6
  %s9 = scalar_select 0, %s8, %s6
  $region1: #{tpu_custom_call.1} parent=0
    #allocation4 [shape = 'u8[8192]{0}', space=vmem, size = 0x2000, scoped, tag = 'input window, operand 0, single buffered']
    #allocation5 [shape = 's32[1]{0}', space=sflag, size = 0x4, scoped, tag = 'scoped memory for tpu_custom_call.1']
    #allocation6 [shape = 's32[1]{0}', space=sflag, size = 0x4, scoped, tag = 'scoped memory for tpu_custom_call.1']
    #allocation7 [shape = 'u8[4096]{0}', space=vmem, size = 0x1000, scoped, tag = 'input window, operand 1, single buffered']
    #allocation8 [shape = 's32[1]{0}', space=sflag, size = 0x4, scoped, tag = 'scoped memory for tpu_custom_call.1']
    #allocation9 [shape = 'u8[16384]{0}', space=vmem, size = 0x4000, scoped, tag = 'input window, operand 2, single buffered']
    #allocation10 [shape = 'u8[16384]{0}', space=vmem, size = 0x4000, scoped, tag = 'input window, operand 3, single buffered']
    #allocation11 [shape = 's32[1]{0}', space=sflag, size = 0x4, scoped, tag = 'scoped memory for tpu_custom_call.1']
    #allocation12 [shape = 'u8[8192]{0}', space=vmem, size = 0x2000, scoped, tag = 'output window, operand 0, single buffered']
    %10 = vsyncpa [#allocation5], 0
    %11 = vsyncpa [#allocation8], 0
    %12 = vsyncpa [#allocation11], 0
    %13 = vsyncpa [#allocation6], 0
    // Predicated region
    $region2: #{tpu_custom_call.1} parent=1 // pred_check
      _
    $region3: #{tpu_custom_call.1} parent=1 // pred_check_branch
      %15 = sbr.rel (0) target = $region5
    $region4: #{tpu_custom_call.1} parent=1 // pred_region
      %s17 = ssub.s32 256, 256
      %18 = vsyncadd [#allocation5], %s17
      %s19 = sshll.u32 [#allocation4], 4
      %s20 = int_to_ptr.vmem [resolvable:$true] %s19
      %25 = dma.hbm_to_vmem [thread:$0]  %s0, 256, %s20, [#allocation5], 32, 32, 2
    $region5: #{tpu_custom_call.1} parent=1 // pred_fallthru
      _
    // Predicated region
    $region6: #{tpu_custom_call.1} parent=1 // pred_check
      _
    $region7: #{tpu_custom_call.1} parent=1 // pred_check_branch
      %27 = sbr.rel (0) target = $region9
    $region8: #{tpu_custom_call.1} parent=1 // pred_region
      %s29 = ssub.s32 128, 128
      %30 = vsyncadd [#allocation8], %s29
      %s31 = sshll.u32 [#allocation7], 4
      %s32 = int_to_ptr.vmem [resolvable:$true] %s31
      %37 = dma.hbm_to_vmem [thread:$0]  %s1, 128, %s32, [#allocation8], 16, 16, 1
    $region9: #{tpu_custom_call.1} parent=1 // pred_fallthru
      _
    // Predicated region
    $region10: #{tpu_custom_call.1} parent=1 // pred_check
      _
    $region11: #{tpu_custom_call.1} parent=1 // pred_check_branch
      %39 = sbr.rel (0) target = $region13
    $region12: #{tpu_custom_call.1} parent=1 // pred_region
      %s41 = ssub.s32 512, 512
      %42 = vsyncadd [#allocation8], %s41
      %s43 = sshll.u32 [#allocation9], 4
      %s44 = int_to_ptr.vmem [resolvable:$true] %s43
      %49 = dma.hbm_to_vmem [thread:$0]  %s2, 512, %s44, [#allocation8], 128, 128, 8
    $region13: #{tpu_custom_call.1} parent=1 // pred_fallthru
      _
    // Predicated region
    $region14: #{tpu_custom_call.1} parent=1 // pred_check
      _
    $region15: #{tpu_custom_call.1} parent=1 // pred_check_branch
      %51 = sbr.rel (0) target = $region17
    $region16: #{tpu_custom_call.1} parent=1 // pred_region
      %s53 = ssub.s32 512, 512
      %54 = vsyncadd [#allocation11], %s53
      %s55 = sshll.u32 [#allocation10], 4
      %s56 = int_to_ptr.vmem [resolvable:$true] %s55
      %61 = dma.hbm_to_vmem [thread:$0]  %s3, 512, %s56, [#allocation11], 128, 128, 8
    $region17: #{tpu_custom_call.1} parent=1 // pred_fallthru
      _
    // Predicated region
    $region18: #{tpu_custom_call.1} parent=1 // pred_check
      _
    $region19: #{tpu_custom_call.1} parent=1 // pred_check_branch
      %63 = sbr.rel (0) target = $region21
    $region20: #{tpu_custom_call.1} parent=1 // pred_region
      _
    $region21: #{tpu_custom_call.1} parent=1 // pred_fallthru
      _
    // Predicated region
    $region22: #{tpu_custom_call.1} parent=1 // pred_check
      _
    $region23: #{tpu_custom_call.1} parent=1 // pred_check_branch
      %65 = sbr.rel (0) target = $region25
    $region24: #{tpu_custom_call.1} parent=1 // pred_region
      %66 = dma.done [#allocation5], 256
    $region25: #{tpu_custom_call.1} parent=1 // pred_fallthru
      _
    // Predicated region
    $region26: #{tpu_custom_call.1} parent=1 // pred_check
      _
    $region27: #{tpu_custom_call.1} parent=1 // pred_check_branch
      %68 = sbr.rel (0) target = $region29
    $region28: #{tpu_custom_call.1} parent=1 // pred_region
      %69 = dma.done [#allocation8], 128
    $region29: #{tpu_custom_call.1} parent=1 // pred_fallthru
      _
    // Predicated region
    $region30: #{tpu_custom_call.1} parent=1 // pred_check
      _
    $region31: #{tpu_custom_call.1} parent=1 // pred_check_branch
      %71 = sbr.rel (0) target = $region33
    $region32: #{tpu_custom_call.1} parent=1 // pred_region
      %72 = dma.done [#allocation8], 512
    $region33: #{tpu_custom_call.1} parent=1 // pred_fallthru
      _
    // Predicated region
    $region34: #{tpu_custom_call.1} parent=1 // pred_check
      _
    $region35: #{tpu_custom_call.1} parent=1 // pred_check_branch
      %74 = sbr.rel (0) target = $region37
    $region36: #{tpu_custom_call.1} parent=1 // pred_region
      %75 = dma.done [#allocation11], 512
    $region37: #{tpu_custom_call.1} parent=1 // pred_fallthru
      _
    %vm76 = vcmask 254976
    %77 = vst.msk [vmem:[#allocation2] sm:$0x3] %vm76, 0.0
    %78 = vst.msk [vmem:[#allocation3] sm:$0x3] %vm76, 0.0
    %v79 = vld [vmem:[#allocation9] sm:$0xff]
    %v80 = vld [vmem:[#allocation9 + $0x8] sm:$0xff]
    %v81 = vld [vmem:[#allocation9 + $0x10] sm:$0xff]
    %v82 = vld [vmem:[#allocation9 + $0x18] sm:$0xff]
    %v83 = vld [vmem:[#allocation10] sm:$0xff]
    %v84 = vld [vmem:[#allocation10 + $0x8] sm:$0xff]
    %v85 = vld [vmem:[#allocation10 + $0x10] sm:$0xff]
    %v86 = vld [vmem:[#allocation10 + $0x18] sm:$0xff]
    %v87 = vld [vmem:[%s4] sm:$0x1]
    loop: start=0, step=1, limit=8
    $region38: #{tpu_custom_call.1} parent=1 // loop_pre_header
      _
    $region39: #{tpu_custom_call.1} parent=1 // loop_header
      %s89 = sphi 0, %s93
      %p90 = scmp.ge.s32.totalorder %s89, 8
    $region40: #{tpu_custom_call.1} parent=1 // loop_header_branch
      %92 = sbr.rel (%p90) target = $region44
    $region41: #{tpu_custom_call.1} parent=1 // loop_body
      %s94 = smul.u32 %s89, 2
      %s95 = scalar_lea.vmem [#allocation4], %s94
      %v96 = vld [vmem:[%s95] sm:$0x3]
      %s97 = scalar_lea.vmem [#allocation7], %s89
      %v98 = vld [vmem:[%s97] sm:$0x1]
      %v100 = vlaneseq
      %v101 = vshrl.u32 %v100, 7
      %v102 = vsub.s32 0, %v101
      %v103 = vrot.slane %v98, %v102
      %v105 = vadd.f32 %v96, %v103
      %v106 = vld [vmem:[#allocation2] sm:$0x3]
      %vm107 = vcmask 261120
      %v109 = vsel %vm107, %v106, 0
      %111 = vmatprep.subr.mxu0 0.0
      %112 = vmatpush1.msra.mxu0 0.0
      %113 = vmatprep.subr.mxu0 0.0
      %114 = vmatpush1.msra.mxu0 0.0
      %115 = vmatprep.subr.mxu0 0.0
      %116 = vmatpush1.msra.mxu0 0.0
      %117 = vmatprep.subr.mxu0 0.0
      %118 = vmatpush1.msra.mxu0 0.0
      %119 = vmatprep.subr.mxu0 0.0
      %120 = vmatpush1.msra.mxu0 0.0
      %121 = vmatprep.subr.mxu0 0.0
      %122 = vmatpush1.msra.mxu0 0.0
      %123 = vmatprep.subr.mxu0 0.0
      %124 = vmatpush1.msra.mxu0 0.0
      %125 = vmatprep.subr.mxu0 0.0
      %126 = vmatpush1.msra.mxu0 0.0
      %127 = vmatprep.subr.mxu0 0.0
      %128 = vmatpush1.msra.mxu0 0.0
      %129 = vmatprep.subr.mxu0 0.0
      %130 = vmatpush1.msra.mxu0 0.0
      %131 = vmatprep.subr.mxu0 0.0
      %132 = vmatpush1.msra.mxu0 0.0
      %133 = vmatprep.subr.mxu0 0.0
      %134 = vmatpush1.msra.mxu0 0.0
      %135 = vmatprep.subr.mxu0 0.0
      %136 = vmatpush1.msra.mxu0 %v86
      %137 = vmatprep.subr.mxu0 0.0
      %138 = vmatpush1.msra.mxu0 %v85
      %139 = vmatprep.subr.mxu0 0.0
      %140 = vmatpush1.msra.mxu0 %v84
      %141 = vmatprep.subr.mxu0 0.0
      %142 = vmatpush1.msra.mxu0 %v83
      %143 = vmatprep.subr.mxu0 0.0
      %144 = vmatpush2.msra.mxu0 0.0
      %145 = vmatprep.subr.mxu0 0.0
      %146 = vmatpush2.msra.mxu0 0.0
      %147 = vmatprep.subr.mxu0 0.0
      %148 = vmatpush2.msra.mxu0 0.0
      %149 = vmatprep.subr.mxu0 0.0
      %150 = vmatpush2.msra.mxu0 0.0
      %151 = vmatprep.subr.mxu0 0.0
      %152 = vmatpush2.msra.mxu0 0.0
      %153 = vmatprep.subr.mxu0 0.0
      %154 = vmatpush2.msra.mxu0 0.0
      %155 = vmatprep.subr.mxu0 0.0
      %156 = vmatpush2.msra.mxu0 0.0
      %157 = vmatprep.subr.mxu0 0.0
      %158 = vmatpush2.msra.mxu0 0.0
      %159 = vmatprep.subr.mxu0 0.0
      %160 = vmatpush2.msra.mxu0 0.0
      %161 = vmatprep.subr.mxu0 0.0
      %162 = vmatpush2.msra.mxu0 0.0
      %163 = vmatprep.subr.mxu0 0.0
      %164 = vmatpush2.msra.mxu0 0.0
      %165 = vmatprep.subr.mxu0 0.0
      %166 = vmatpush2.msra.mxu0 0.0
      %167 = vmatprep.subr.mxu0 0.0
      %168 = vmatpush2.msra.mxu0 0.0
      %169 = vmatprep.subr.mxu0 0.0
      %170 = vmatpush2.msra.mxu0 0.0
      %171 = vmatprep.subr.mxu0 0.0
      %172 = vmatpush2.msra.mxu0 0.0
      %173 = vmatprep.subr.mxu0 0.0
      %174 = vmatpush2.msra.mxu0 0.0
      %175 = vmatprep.mubr.f32.mxu0 0.0
      %176 = vmatmul.mubr.f32.gmra.mxu0 %v109
      %v177 = vpop.f32.mrf.mxu0
      %v178 = vadd.f32 0.0, %v177
      %v179 = vpop.f32.mrf.mxu0
      %180 = vdwg.mxu0
      %v182 = vsel %vm107, %v105, 0
      %184 = vmatprep.subr.mxu0 0.0
      %185 = vmatpush1.msra.mxu0 0.0
      %186 = vmatprep.subr.mxu0 0.0
      %187 = vmatpush1.msra.mxu0 0.0
      %188 = vmatprep.subr.mxu0 0.0
      %189 = vmatpush1.msra.mxu0 0.0
      %190 = vmatprep.subr.mxu0 0.0
      %191 = vmatpush1.msra.mxu0 0.0
      %192 = vmatprep.subr.mxu0 0.0
      %193 = vmatpush1.msra.mxu0 0.0
      %194 = vmatprep.subr.mxu0 0.0
      %195 = vmatpush1.msra.mxu0 0.0
      %196 = vmatprep.subr.mxu0 0.0
      %197 = vmatpush1.msra.mxu0 0.0
      %198 = vmatprep.subr.mxu0 0.0
      %199 = vmatpush1.msra.mxu0 0.0
      %200 = vmatprep.subr.mxu0 0.0
      %201 = vmatpush1.msra.mxu0 0.0
      %202 = vmatprep.subr.mxu0 0.0
      %203 = vmatpush1.msra.mxu0 0.0
      %204 = vmatprep.subr.mxu0 0.0
      %205 = vmatpush1.msra.mxu0 0.0
      %206 = vmatprep.subr.mxu0 0.0
      %207 = vmatpush1.msra.mxu0 0.0
      %208 = vmatprep.subr.mxu0 0.0
      %209 = vmatpush1.msra.mxu0 %v82
      %210 = vmatprep.subr.mxu0 0.0
      %211 = vmatpush1.msra.mxu0 %v81
      %212 = vmatprep.subr.mxu0 0.0
      %213 = vmatpush1.msra.mxu0 %v80
      %214 = vmatprep.subr.mxu0 0.0
      %215 = vmatpush1.msra.mxu0 %v79
      %216 = vmatprep.subr.mxu0 0.0
      %217 = vmatpush2.msra.mxu0 0.0
      %218 = vmatprep.subr.mxu0 0.0
      %219 = vmatpush2.msra.mxu0 0.0
      %220 = vmatprep.subr.mxu0 0.0
      %221 = vmatpush2.msra.mxu0 0.0
      %222 = vmatprep.subr.mxu0 0.0
      %223 = vmatpush2.msra.mxu0 0.0
      %224 = vmatprep.subr.mxu0 0.0
      %225 = vmatpush2.msra.mxu0 0.0
      %226 = vmatprep.subr.mxu0 0.0
      %227 = vmatpush2.msra.mxu0 0.0
      %228 = vmatprep.subr.mxu0 0.0
      %229 = vmatpush2.msra.mxu0 0.0
      %230 = vmatprep.subr.mxu0 0.0
      %231 = vmatpush2.msra.mxu0 0.0
      %232 = vmatprep.subr.mxu0 0.0
      %233 = vmatpush2.msra.mxu0 0.0
      %234 = vmatprep.subr.mxu0 0.0
      %235 = vmatpush2.msra.mxu0 0.0
      %236 = vmatprep.subr.mxu0 0.0
      %237 = vmatpush2.msra.mxu0 0.0
      %238 = vmatprep.subr.mxu0 0.0
      %239 = vmatpush2.msra.mxu0 0.0
      %240 = vmatprep.subr.mxu0 0.0
      %241 = vmatpush2.msra.mxu0 0.0
      %242 = vmatprep.subr.mxu0 0.0
      %243 = vmatpush2.msra.mxu0 0.0
      %244 = vmatprep.subr.mxu0 0.0
      %245 = vmatpush2.msra.mxu0 0.0
      %246 = vmatprep.subr.mxu0 0.0
      %247 = vmatpush2.msra.mxu0 0.0
      %248 = vmatprep.mubr.f32.mxu0 0.0
      %249 = vmatmul.mubr.f32.gmra.mxu0 %v182
      %v250 = vpop.f32.mrf.mxu0
      %v251 = vadd.f32 %v178, %v250
      %v252 = vpop.f32.mrf.mxu0
      %253 = vdwg.mxu0
      %v255 = vlaneseq
      %v256 = vshrl.u32 %v255, 7
      %v257 = vsub.s32 0, %v256
      %v258 = vrot.slane %v87, %v257
      %v260 = vadd.f32 %v251, %v258
      %v261 = vsub.f32 0.0, %v260
      %v262 = vmul.f32 %v261, 1.442695
      %v263 = vpow.pop %v262
      %v264 = vadd.f32 %v263, 1.0
      %v265 = vrcp.pop %v264
      %v266 = vmul.f32 1.0, %v265
      %v267 = vtanh.pop %v260
      %v268 = vld [vmem:[#allocation3] sm:$0x3]
      %270 = vrot.lane.b32.xlu0 %v268, 32
      %v271 = vpop.permute.xlu0 %270
      %v273 = vmul.f32 %v266, %v271
      %275 = vrot.lane.b32.xlu0 %v267, 64
      %v276 = vpop.permute.xlu0 %275
      %v278 = vmul.f32 %v266, %v276
      %280 = vrot.lane.b32.xlu0 %v278, 32
      %v281 = vpop.permute.xlu0 %280
      %v283 = vadd.f32 %v273, %v281
      %v284 = vtanh.pop %v283
      %286 = vrot.lane.b32.xlu0 %v284, 64
      %v287 = vpop.permute.xlu0 %286
      %v289 = vmul.f32 %v266, %v287
      %291 = vrot.lane.b32.xlu0 %v283, 96
      %v292 = vpop.permute.xlu0 %291
      %294 = vst.msk [vmem:[#allocation3] sm:$0x3] %vm76, %v292
      %296 = vrot.lane.b32.xlu0 %v289, 32
      %v297 = vpop.permute.xlu0 %296
      %299 = vst.msk [vmem:[#allocation2] sm:$0x3] %vm76, %v297
      %s300 = scalar_lea.vmem [#allocation12], %s94
      %301 = vst.msk [vmem:[%s300] sm:$0x3] %vm76, %v297
    $region42: #{tpu_custom_call.1} parent=1 // loop_footer
      %s93 = sadd.s32 1, %s89
    $region43: #{tpu_custom_call.1} parent=1 // loop_footer_branch
      %88 = sbr.rel target = $region39
    $region44: #{tpu_custom_call.1} parent=1 // loop_exit
      _
    // Predicated region
    $region45: #{tpu_custom_call.1} parent=1 // pred_check
      _
    $region46: #{tpu_custom_call.1} parent=1 // pred_check_branch
      %303 = sbr.rel (0) target = $region48
    $region47: #{tpu_custom_call.1} parent=1 // pred_region
      %s305 = ssub.s32 256, 256
      %306 = vsyncadd [#allocation6], %s305
      %s307 = sshll.u32 [#allocation12], 4
      %s308 = int_to_ptr.vmem [resolvable:$true] %s307
      %313 = dma.vmem_to_hbm [thread:$0]  %s308, 256, %s5, [#allocation6], 32, 32, 2
    $region48: #{tpu_custom_call.1} parent=1 // pred_fallthru
      _
    // Predicated region
    $region49: #{tpu_custom_call.1} parent=1 // pred_check
      _
    $region50: #{tpu_custom_call.1} parent=1 // pred_check_branch
      %315 = sbr.rel (0) target = $region52
    $region51: #{tpu_custom_call.1} parent=1 // pred_region
      %316 = dma.done [#allocation6], 256
    $region52: #{tpu_custom_call.1} parent=1 // pred_fallthru
      _
    %317 = vsyncpa [#allocation5], 1
    %318 = vsyncpa [#allocation8], 1
    %319 = vsyncpa [#allocation11], 1
    %320 = vsyncpa [#allocation6], 1

</llo_original>
